<compile_context>
chip_gen: v5e
topology: v5e:2x2
jax: 0.10.0
libtpu: 0.0.40
codegen_flags: <defaults>
</compile_context>

<pallas_src>
import math

import jax
import jax.numpy as jnp
from jax import lax
from jax.experimental import pallas as pl
from jax.experimental.pallas import tpu as pltpu

# ---- model hyper-parameters (small, consistent with the module) -------------
B = 2            # batch
S = 8            # sequence length (num queries == num key/value pairs)
D = 32           # num_hiddens == key_size == query_size == value_size
NUM_HEADS = 4
DH = D // NUM_HEADS
FFN_HIDDEN = 64  # ffn_num_hiddens
LN_EPS = 1e-5


def _layernorm(x, gamma, beta):
    mu = jnp.mean(x, axis=-1, keepdims=True)
    var = jnp.mean((x - mu) ** 2, axis=-1, keepdims=True)
    return (x - mu) * lax.rsqrt(var + LN_EPS) * gamma + beta


def encoder_block_kernel(x_ref,            # (B, S, D) f32
                         vl_ref,           # (B, 1, 1) int32 valid lengths
                         wqkv_ref,         # (D, 3D)  fused [Wq | Wk | Wv]
                         woh_ref,          # (H, DH, D)  W_o split by head rows
                         g1_ref, b1_ref,   # (1, D) LayerNorm-1 affine
                         w1_ref, bf1_ref,  # (D, FFN_HIDDEN), (1, FFN_HIDDEN)
                         w2_ref, bf2_ref,  # (FFN_HIDDEN, D), (1, D)
                         g2_ref, b2_ref,   # (1, D) LayerNorm-2 affine
                         out_ref):         # (B, S, D)
    x3 = x_ref[...]                               # (B, S, D)
    x2 = x3.reshape(B * S, D)                     # tile-aligned leading-dim merge

    # ---- fused Q/K/V projection: one MXU push --------------------------------
    qkv2 = jnp.dot(x2, wqkv_ref[...], preferred_element_type=jnp.float32)  # (B*S, 3D)
    qkv3 = qkv2.reshape(B, S, 3 * D)                                       # (B, S, 3D)

    # ---- key mask from valid_lens (built once, hoisted out of the head loop) -
    key_pos = lax.broadcasted_iota(jnp.int32, (B, S, S), 2)    # key index per (b, q)
    kmask = key_pos < vl_ref[...]                              # (B, S, S) bool
    neg_big = jnp.float32(-1.0e6)
    scale = jnp.float32(1.0 / math.sqrt(DH))

    # ---- multi-head self-attention: batched over B, static unroll over heads -
    attn_out = jnp.zeros((B * S, D), jnp.float32)
    for h in range(NUM_HEADS):
        qh = qkv3[:, :, h * DH:(h + 1) * DH]                       # (B, S, DH)
        kh = qkv3[:, :, D + h * DH:D + (h + 1) * DH]               # (B, S, DH)
        vh = qkv3[:, :, 2 * D + h * DH:2 * D + (h + 1) * DH]       # (B, S, DH)

        scores = jnp.einsum('bqd,bkd->bqk', qh, kh,
                            preferred_element_type=jnp.float32) * scale   # (B,S,S)
        scores = jnp.where(kmask, scores, neg_big)                 # masked_softmax
        scores = scores - jnp.max(scores, axis=-1, keepdims=True)
        e = jnp.exp(scores)
        denom = jnp.sum(e, axis=-1, keepdims=True)                 # (B, S, 1)
        inv = pl.reciprocal(denom, approx=True)                    # EUP slot
        inv = inv * (2.0 - denom * inv)                            # 1 Newton step -> ~f32 exact
        attn = e * inv

        ctx = jnp.einsum('bqk,bkd->bqd', attn, vh,
                         preferred_element_type=jnp.float32)       # (B, S, DH)
        # Output projection without a lane concatenate:
        #   concat_h(ctx_h) @ W_o == sum_h ctx_h @ W_o[h*DH:(h+1)*DH, :]
        attn_out = attn_out + jnp.dot(ctx.reshape(B * S, DH), woh_ref[h],
                                      preferred_element_type=jnp.float32)

    # ---- AddNorm 1 ------------------------------------------------------------
    y = _layernorm(attn_out + x2, g1_ref[...], b1_ref[...])

    # ---- position-wise FFN ----------------------------------------------------
    h1 = jnp.maximum(
        jnp.dot(y, w1_ref[...], preferred_element_type=jnp.float32) + bf1_ref[...],
        0.0)
    ffn = jnp.dot(h1, w2_ref[...], preferred_element_type=jnp.float32) + bf2_ref[...]

    # ---- AddNorm 2 ------------------------------------------------------------
    out = _layernorm(ffn + y, g2_ref[...], b2_ref[...])
    out_ref[...] = out.reshape(B, S, D)


def encoder_block(x, valid_lens, params):
    """x: (B, S, D) float32, valid_lens: (B,) int32."""
    # Wrapper-side (free) weight re-layouts for the kernel.
    wqkv = jnp.concatenate([params["wq"], params["wk"], params["wv"]], axis=1)  # (D, 3D)
    woh = params["wo"].reshape(NUM_HEADS, DH, D)                                # (H, DH, D)
    vl = valid_lens.astype(jnp.int32).reshape(B, 1, 1)

    n_inputs = 12
    fn = pl.pallas_call(
        encoder_block_kernel,
        out_shape=jax.ShapeDtypeStruct((B, S, D), jnp.float32),
        in_specs=[pl.BlockSpec(memory_space=pltpu.MemorySpace.VMEM)] * n_inputs,
        out_specs=pl.BlockSpec(memory_space=pltpu.MemorySpace.VMEM),
    )
    return fn(x, vl, wqkv, woh,
              params["g1"], params["b1"],
              params["w1"], params["bf1"], params["w2"], params["bf2"],
              params["g2"], params["b2"])


# ---- pure-JAX reference (same math) for a sanity check -----------------------
def ref_encoder_block(x, valid_lens, p):
    def one(xb, vl):
        q = xb @ p["wq"]; k = xb @ p["wk"]; v = xb @ p["wv"]
        mask = jnp.arange(S)[None, :] < vl
        outs = []
        for h in range(NUM_HEADS):
            qh = q[:, h * DH:(h + 1) * DH]
            kh = k[:, h * DH:(h + 1) * DH]
            vh = v[:, h * DH:(h + 1) * DH]
            sc = qh @ kh.T / math.sqrt(DH)
            sc = jnp.where(mask, sc, -1.0e6)
            outs.append(jax.nn.softmax(sc, axis=-1) @ vh)
        ao = jnp.concatenate(outs, -1) @ p["wo"]
        y = _layernorm(ao + xb, p["g1"], p["b1"])
        f = jnp.maximum(y @ p["w1"] + p["bf1"], 0.0) @ p["w2"] + p["bf2"]
        return _layernorm(f + y, p["g2"], p["b2"])
    return jax.vmap(one)(x, valid_lens)


if __name__ == "__main__":
    key = jax.random.PRNGKey(0)
    ks = jax.random.split(key, 8)

    init = lambda k, shape: (0.05 * jax.random.normal(k, shape)).astype(jnp.float32)
    params = {
        "wq": init(ks[0], (D, D)),
        "wk": init(ks[1], (D, D)),
        "wv": init(ks[2], (D, D)),
        "wo": init(ks[3], (D, D)),
        "g1": jnp.ones((1, D), jnp.float32),
        "b1": jnp.zeros((1, D), jnp.float32),
        "w1": init(ks[4], (D, FFN_HIDDEN)),
        "bf1": jnp.zeros((1, FFN_HIDDEN), jnp.float32),
        "w2": init(ks[5], (FFN_HIDDEN, D)),
        "bf2": jnp.zeros((1, D), jnp.float32),
        "g2": jnp.ones((1, D), jnp.float32),
        "b2": jnp.zeros((1, D), jnp.float32),
    }

    x = jax.random.normal(ks[6], (B, S, D), dtype=jnp.float32)
    valid_lens = jnp.array([5, 8], dtype=jnp.int32)

    out = encoder_block(x, valid_lens, params)
    out = jax.block_until_ready(out)

    ref = ref_encoder_block(x, valid_lens, params)
    assert out.shape == (B, S, D)
    # 1e-3 tolerance: the kernel uses the EUP approximate reciprocal (+ one
    # Newton refinement) for the softmax denominator instead of an exact divide.
    assert jnp.allclose(out, ref, atol=1e-3, rtol=1e-3), "mismatch vs JAX reference"

    print("KERNEL_OK")
</pallas_src>

<mosaic_0001>
module attributes {stable_mosaic.version = 11 : i64} {
  func.func @encoder_block_kernel(%arg0: memref<2x8x32xf32, #tpu.memory_space<vmem>>, %arg1: memref<2x1x1xi32, #tpu.memory_space<vmem>>, %arg2: memref<32x96xf32, #tpu.memory_space<vmem>>, %arg3: memref<4x8x32xf32, #tpu.memory_space<vmem>>, %arg4: memref<1x32xf32, #tpu.memory_space<vmem>>, %arg5: memref<1x32xf32, #tpu.memory_space<vmem>>, %arg6: memref<32x64xf32, #tpu.memory_space<vmem>>, %arg7: memref<1x64xf32, #tpu.memory_space<vmem>>, %arg8: memref<64x32xf32, #tpu.memory_space<vmem>>, %arg9: memref<1x32xf32, #tpu.memory_space<vmem>>, %arg10: memref<1x32xf32, #tpu.memory_space<vmem>>, %arg11: memref<1x32xf32, #tpu.memory_space<vmem>>, %arg12: memref<2x8x32xf32, #tpu.memory_space<vmem>>) attributes {dimension_semantics = [], scalar_prefetch = 0 : i64, scratch_operands = 0 : i64, tpu.core_type = #tpu.core_type<tc>} {
    %c0 = arith.constant 0 : index
    %c0_0 = arith.constant 0 : index
    %c0_1 = arith.constant 0 : index
    %0 = vector.load %arg0[%c0, %c0_0, %c0_1] : memref<2x8x32xf32, #tpu.memory_space<vmem>>, vector<2x8x32xf32>
    %1 = vector.shape_cast %0 : vector<2x8x32xf32> to vector<16x32xf32>
    %c0_2 = arith.constant 0 : index
    %c0_3 = arith.constant 0 : index
    %2 = vector.load %arg2[%c0_2, %c0_3] : memref<32x96xf32, #tpu.memory_space<vmem>>, vector<32x96xf32>
    %cst = arith.constant dense<0.000000e+00> : vector<16x96xf32>
    %3 = tpu.matmul %1, %2, %cst {dimension_numbers = #tpu.dot_dimension_numbers<[1], [0], [0], [1], [0, 0, 1, 1], [], []>} : vector<16x32xf32>, vector<32x96xf32>, vector<16x96xf32> -> vector<16x96xf32>
    %4 = vector.shape_cast %3 : vector<16x96xf32> to vector<2x8x96xf32>
    %5 = tpu.iota {dimensions = array<i32: 2>} : vector<2x8x8xi32>
    %c0_4 = arith.constant 0 : index
    %c0_5 = arith.constant 0 : index
    %c0_6 = arith.constant 0 : index
    %6 = vector.load %arg1[%c0_4, %c0_5, %c0_6] : memref<2x1x1xi32, #tpu.memory_space<vmem>>, vector<2x1x1xi32>
    %7 = vector.broadcast %6 : vector<2x1x1xi32> to vector<2x8x8xi32>
    %8 = arith.cmpi slt, %5, %7 : vector<2x8x8xi32>
    %cst_7 = arith.constant 0.000000e+00 : f32
    %9 = vector.broadcast %cst_7 : f32 to vector<16x32xf32>
    %10 = vector.extract_strided_slice %4 {offsets = [0, 0, 0], sizes = [2, 8, 8], strides = [1, 1, 1]} : vector<2x8x96xf32> to vector<2x8x8xf32>
    %11 = vector.extract_strided_slice %4 {offsets = [0, 0, 32], sizes = [2, 8, 8], strides = [1, 1, 1]} : vector<2x8x96xf32> to vector<2x8x8xf32>
    %12 = vector.extract_strided_slice %4 {offsets = [0, 0, 64], sizes = [2, 8, 8], strides = [1, 1, 1]} : vector<2x8x96xf32> to vector<2x8x8xf32>
    "tpu.trace_start"() <{level = 10 : i32, message = "bqd,bkd->bqk"}> : () -> ()
    %cst_8 = arith.constant dense<0.000000e+00> : vector<2x8x8xf32>
    %13 = tpu.matmul %10, %11, %cst_8 {dimension_numbers = #tpu.dot_dimension_numbers<[2], [2], [1], [1], [0, 0, 0, 1, 1, 1], [0], [0]>} : vector<2x8x8xf32>, vector<2x8x8xf32>, vector<2x8x8xf32> -> vector<2x8x8xf32>
    "tpu.trace_stop"() : () -> ()
    %cst_9 = arith.constant 0.353553385 : f32
    %14 = vector.broadcast %cst_9 : f32 to vector<2x8x8xf32>
    %15 = arith.mulf %13, %14 : vector<2x8x8xf32>
    %cst_10 = arith.constant -1.000000e+06 : f32
    %16 = vector.broadcast %cst_10 : f32 to vector<2x8x8xf32>
    %17 = arith.select %8, %15, %16 : vector<2x8x8xi1>, vector<2x8x8xf32>
    %cst_11 = arith.constant dense<0xFF800000> : vector<2x8xf32>
    %18 = vector.multi_reduction <maximumf>, %17, %cst_11 [2] : vector<2x8x8xf32> to vector<2x8xf32>
    %19 = vector.shape_cast %18 : vector<2x8xf32> to vector<2x8x1xf32>
    %20 = vector.broadcast %19 : vector<2x8x1xf32> to vector<2x8x8xf32>
    %21 = arith.subf %17, %20 : vector<2x8x8xf32>
    %22 = math.exp %21 : vector<2x8x8xf32>
    %cst_12 = arith.constant dense<0.000000e+00> : vector<2x8xf32>
    %23 = vector.multi_reduction <add>, %22, %cst_12 [2] : vector<2x8x8xf32> to vector<2x8xf32>
    %24 = vector.shape_cast %23 : vector<2x8xf32> to vector<2x8x1xf32>
    %25 = tpu.reciprocal %24 {approx = true} : vector<2x8x1xf32> -> vector<2x8x1xf32>
    %26 = arith.mulf %24, %25 : vector<2x8x1xf32>
    %cst_13 = arith.constant 2.000000e+00 : f32
    %27 = vector.broadcast %cst_13 : f32 to vector<2x8x1xf32>
    %28 = arith.subf %27, %26 : vector<2x8x1xf32>
    %29 = arith.mulf %25, %28 : vector<2x8x1xf32>
    %30 = vector.broadcast %29 : vector<2x8x1xf32> to vector<2x8x8xf32>
    %31 = arith.mulf %22, %30 : vector<2x8x8xf32>
    "tpu.trace_start"() <{level = 10 : i32, message = "bqk,bkd->bqd"}> : () -> ()
    %cst_14 = arith.constant dense<0.000000e+00> : vector<2x8x8xf32>
    %32 = tpu.matmul %31, %12, %cst_14 {dimension_numbers = #tpu.dot_dimension_numbers<[2], [1], [1], [2], [0, 0, 0, 1, 1, 2], [0], [0]>} : vector<2x8x8xf32>, vector<2x8x8xf32>, vector<2x8x8xf32> -> vector<2x8x8xf32>
    "tpu.trace_stop"() : () -> ()
    %33 = vector.shape_cast %32 : vector<2x8x8xf32> to vector<16x8xf32>
    %c0_15 = arith.constant 0 : index
    %c0_16 = arith.constant 0 : index
    %c0_17 = arith.constant 0 : index
    %34 = vector.load %arg3[%c0_15, %c0_16, %c0_17] : memref<4x8x32xf32, #tpu.memory_space<vmem>>, vector<1x8x32xf32>
    %35 = vector.shape_cast %34 : vector<1x8x32xf32> to vector<8x32xf32>
    %cst_18 = arith.constant dense<0.000000e+00> : vector<16x32xf32>
    %36 = tpu.matmul %33, %35, %cst_18 {dimension_numbers = #tpu.dot_dimension_numbers<[1], [0], [0], [1], [0, 0, 1, 1], [], []>} : vector<16x8xf32>, vector<8x32xf32>, vector<16x32xf32> -> vector<16x32xf32>
    %37 = arith.addf %9, %36 : vector<16x32xf32>
    %38 = vector.extract_strided_slice %4 {offsets = [0, 0, 8], sizes = [2, 8, 8], strides = [1, 1, 1]} : vector<2x8x96xf32> to vector<2x8x8xf32>
    %39 = vector.extract_strided_slice %4 {offsets = [0, 0, 40], sizes = [2, 8, 8], strides = [1, 1, 1]} : vector<2x8x96xf32> to vector<2x8x8xf32>
    %40 = vector.extract_strided_slice %4 {offsets = [0, 0, 72], sizes = [2, 8, 8], strides = [1, 1, 1]} : vector<2x8x96xf32> to vector<2x8x8xf32>
    "tpu.trace_start"() <{level = 10 : i32, message = "bqd,bkd->bqk"}> : () -> ()
    %cst_19 = arith.constant dense<0.000000e+00> : vector<2x8x8xf32>
    %41 = tpu.matmul %38, %39, %cst_19 {dimension_numbers = #tpu.dot_dimension_numbers<[2], [2], [1], [1], [0, 0, 0, 1, 1, 1], [0], [0]>} : vector<2x8x8xf32>, vector<2x8x8xf32>, vector<2x8x8xf32> -> vector<2x8x8xf32>
    "tpu.trace_stop"() : () -> ()
    %cst_20 = arith.constant 0.353553385 : f32
    %42 = vector.broadcast %cst_20 : f32 to vector<2x8x8xf32>
    %43 = arith.mulf %41, %42 : vector<2x8x8xf32>
    %cst_21 = arith.constant -1.000000e+06 : f32
    %44 = vector.broadcast %cst_21 : f32 to vector<2x8x8xf32>
    %45 = arith.select %8, %43, %44 : vector<2x8x8xi1>, vector<2x8x8xf32>
    %cst_22 = arith.constant dense<0xFF800000> : vector<2x8xf32>
    %46 = vector.multi_reduction <maximumf>, %45, %cst_22 [2] : vector<2x8x8xf32> to vector<2x8xf32>
    %47 = vector.shape_cast %46 : vector<2x8xf32> to vector<2x8x1xf32>
    %48 = vector.broadcast %47 : vector<2x8x1xf32> to vector<2x8x8xf32>
    %49 = arith.subf %45, %48 : vector<2x8x8xf32>
    %50 = math.exp %49 : vector<2x8x8xf32>
    %cst_23 = arith.constant dense<0.000000e+00> : vector<2x8xf32>
    %51 = vector.multi_reduction <add>, %50, %cst_23 [2] : vector<2x8x8xf32> to vector<2x8xf32>
    %52 = vector.shape_cast %51 : vector<2x8xf32> to vector<2x8x1xf32>
    %53 = tpu.reciprocal %52 {approx = true} : vector<2x8x1xf32> -> vector<2x8x1xf32>
    %54 = arith.mulf %52, %53 : vector<2x8x1xf32>
    %cst_24 = arith.constant 2.000000e+00 : f32
    %55 = vector.broadcast %cst_24 : f32 to vector<2x8x1xf32>
    %56 = arith.subf %55, %54 : vector<2x8x1xf32>
    %57 = arith.mulf %53, %56 : vector<2x8x1xf32>
    %58 = vector.broadcast %57 : vector<2x8x1xf32> to vector<2x8x8xf32>
    %59 = arith.mulf %50, %58 : vector<2x8x8xf32>
    "tpu.trace_start"() <{level = 10 : i32, message = "bqk,bkd->bqd"}> : () -> ()
    %cst_25 = arith.constant dense<0.000000e+00> : vector<2x8x8xf32>
    %60 = tpu.matmul %59, %40, %cst_25 {dimension_numbers = #tpu.dot_dimension_numbers<[2], [1], [1], [2], [0, 0, 0, 1, 1, 2], [0], [0]>} : vector<2x8x8xf32>, vector<2x8x8xf32>, vector<2x8x8xf32> -> vector<2x8x8xf32>
    "tpu.trace_stop"() : () -> ()
    %61 = vector.shape_cast %60 : vector<2x8x8xf32> to vector<16x8xf32>
    %c1 = arith.constant 1 : index
    %c0_26 = arith.constant 0 : index
    %c0_27 = arith.constant 0 : index
    %62 = vector.load %arg3[%c1, %c0_26, %c0_27] : memref<4x8x32xf32, #tpu.memory_space<vmem>>, vector<1x8x32xf32>
    %63 = vector.shape_cast %62 : vector<1x8x32xf32> to vector<8x32xf32>
    %cst_28 = arith.constant dense<0.000000e+00> : vector<16x32xf32>
    %64 = tpu.matmul %61, %63, %cst_28 {dimension_numbers = #tpu.dot_dimension_numbers<[1], [0], [0], [1], [0, 0, 1, 1], [], []>} : vector<16x8xf32>, vector<8x32xf32>, vector<16x32xf32> -> vector<16x32xf32>
    %65 = arith.addf %37, %64 : vector<16x32xf32>
    %66 = vector.extract_strided_slice %4 {offsets = [0, 0, 16], sizes = [2, 8, 8], strides = [1, 1, 1]} : vector<2x8x96xf32> to vector<2x8x8xf32>
    %67 = vector.extract_strided_slice %4 {offsets = [0, 0, 48], sizes = [2, 8, 8], strides = [1, 1, 1]} : vector<2x8x96xf32> to vector<2x8x8xf32>
    %68 = vector.extract_strided_slice %4 {offsets = [0, 0, 80], sizes = [2, 8, 8], strides = [1, 1, 1]} : vector<2x8x96xf32> to vector<2x8x8xf32>
    "tpu.trace_start"() <{level = 10 : i32, message = "bqd,bkd->bqk"}> : () -> ()
    %cst_29 = arith.constant dense<0.000000e+00> : vector<2x8x8xf32>
    %69 = tpu.matmul %66, %67, %cst_29 {dimension_numbers = #tpu.dot_dimension_numbers<[2], [2], [1], [1], [0, 0, 0, 1, 1, 1], [0], [0]>} : vector<2x8x8xf32>, vector<2x8x8xf32>, vector<2x8x8xf32> -> vector<2x8x8xf32>
    "tpu.trace_stop"() : () -> ()
    %cst_30 = arith.constant 0.353553385 : f32
    %70 = vector.broadcast %cst_30 : f32 to vector<2x8x8xf32>
    %71 = arith.mulf %69, %70 : vector<2x8x8xf32>
    %cst_31 = arith.constant -1.000000e+06 : f32
    %72 = vector.broadcast %cst_31 : f32 to vector<2x8x8xf32>
    %73 = arith.select %8, %71, %72 : vector<2x8x8xi1>, vector<2x8x8xf32>
    %cst_32 = arith.constant dense<0xFF800000> : vector<2x8xf32>
    %74 = vector.multi_reduction <maximumf>, %73, %cst_32 [2] : vector<2x8x8xf32> to vector<2x8xf32>
    %75 = vector.shape_cast %74 : vector<2x8xf32> to vector<2x8x1xf32>
    %76 = vector.broadcast %75 : vector<2x8x1xf32> to vector<2x8x8xf32>
    %77 = arith.subf %73, %76 : vector<2x8x8xf32>
    %78 = math.exp %77 : vector<2x8x8xf32>
    %cst_33 = arith.constant dense<0.000000e+00> : vector<2x8xf32>
    %79 = vector.multi_reduction <add>, %78, %cst_33 [2] : vector<2x8x8xf32> to vector<2x8xf32>
    %80 = vector.shape_cast %79 : vector<2x8xf32> to vector<2x8x1xf32>
    %81 = tpu.reciprocal %80 {approx = true} : vector<2x8x1xf32> -> vector<2x8x1xf32>
    %82 = arith.mulf %80, %81 : vector<2x8x1xf32>
    %cst_34 = arith.constant 2.000000e+00 : f32
    %83 = vector.broadcast %cst_34 : f32 to vector<2x8x1xf32>
    %84 = arith.subf %83, %82 : vector<2x8x1xf32>
    %85 = arith.mulf %81, %84 : vector<2x8x1xf32>
    %86 = vector.broadcast %85 : vector<2x8x1xf32> to vector<2x8x8xf32>
    %87 = arith.mulf %78, %86 : vector<2x8x8xf32>
    "tpu.trace_start"() <{level = 10 : i32, message = "bqk,bkd->bqd"}> : () -> ()
    %cst_35 = arith.constant dense<0.000000e+00> : vector<2x8x8xf32>
    %88 = tpu.matmul %87, %68, %cst_35 {dimension_numbers = #tpu.dot_dimension_numbers<[2], [1], [1], [2], [0, 0, 0, 1, 1, 2], [0], [0]>} : vector<2x8x8xf32>, vector<2x8x8xf32>, vector<2x8x8xf32> -> vector<2x8x8xf32>
    "tpu.trace_stop"() : () -> ()
    %89 = vector.shape_cast %88 : vector<2x8x8xf32> to vector<16x8xf32>
    %c2 = arith.constant 2 : index
    %c0_36 = arith.constant 0 : index
    %c0_37 = arith.constant 0 : index
    %90 = vector.load %arg3[%c2, %c0_36, %c0_37] : memref<4x8x32xf32, #tpu.memory_space<vmem>>, vector<1x8x32xf32>
    %91 = vector.shape_cast %90 : vector<1x8x32xf32> to vector<8x32xf32>
    %cst_38 = arith.constant dense<0.000000e+00> : vector<16x32xf32>
    %92 = tpu.matmul %89, %91, %cst_38 {dimension_numbers = #tpu.dot_dimension_numbers<[1], [0], [0], [1], [0, 0, 1, 1], [], []>} : vector<16x8xf32>, vector<8x32xf32>, vector<16x32xf32> -> vector<16x32xf32>
    %93 = arith.addf %65, %92 : vector<16x32xf32>
    %94 = vector.extract_strided_slice %4 {offsets = [0, 0, 24], sizes = [2, 8, 8], strides = [1, 1, 1]} : vector<2x8x96xf32> to vector<2x8x8xf32>
    %95 = vector.extract_strided_slice %4 {offsets = [0, 0, 56], sizes = [2, 8, 8], strides = [1, 1, 1]} : vector<2x8x96xf32> to vector<2x8x8xf32>
    %96 = vector.extract_strided_slice %4 {offsets = [0, 0, 88], sizes = [2, 8, 8], strides = [1, 1, 1]} : vector<2x8x96xf32> to vector<2x8x8xf32>
    "tpu.trace_start"() <{level = 10 : i32, message = "bqd,bkd->bqk"}> : () -> ()
    %cst_39 = arith.constant dense<0.000000e+00> : vector<2x8x8xf32>
    %97 = tpu.matmul %94, %95, %cst_39 {dimension_numbers = #tpu.dot_dimension_numbers<[2], [2], [1], [1], [0, 0, 0, 1, 1, 1], [0], [0]>} : vector<2x8x8xf32>, vector<2x8x8xf32>, vector<2x8x8xf32> -> vector<2x8x8xf32>
    "tpu.trace_stop"() : () -> ()
    %cst_40 = arith.constant 0.353553385 : f32
    %98 = vector.broadcast %cst_40 : f32 to vector<2x8x8xf32>
    %99 = arith.mulf %97, %98 : vector<2x8x8xf32>
    %cst_41 = arith.constant -1.000000e+06 : f32
    %100 = vector.broadcast %cst_41 : f32 to vector<2x8x8xf32>
    %101 = arith.select %8, %99, %100 : vector<2x8x8xi1>, vector<2x8x8xf32>
    %cst_42 = arith.constant dense<0xFF800000> : vector<2x8xf32>
    %102 = vector.multi_reduction <maximumf>, %101, %cst_42 [2] : vector<2x8x8xf32> to vector<2x8xf32>
    %103 = vector.shape_cast %102 : vector<2x8xf32> to vector<2x8x1xf32>
    %104 = vector.broadcast %103 : vector<2x8x1xf32> to vector<2x8x8xf32>
    %105 = arith.subf %101, %104 : vector<2x8x8xf32>
    %106 = math.exp %105 : vector<2x8x8xf32>
    %cst_43 = arith.constant dense<0.000000e+00> : vector<2x8xf32>
    %107 = vector.multi_reduction <add>, %106, %cst_43 [2] : vector<2x8x8xf32> to vector<2x8xf32>
    %108 = vector.shape_cast %107 : vector<2x8xf32> to vector<2x8x1xf32>
    %109 = tpu.reciprocal %108 {approx = true} : vector<2x8x1xf32> -> vector<2x8x1xf32>
    %110 = arith.mulf %108, %109 : vector<2x8x1xf32>
    %cst_44 = arith.constant 2.000000e+00 : f32
    %111 = vector.broadcast %cst_44 : f32 to vector<2x8x1xf32>
    %112 = arith.subf %111, %110 : vector<2x8x1xf32>
    %113 = arith.mulf %109, %112 : vector<2x8x1xf32>
    %114 = vector.broadcast %113 : vector<2x8x1xf32> to vector<2x8x8xf32>
    %115 = arith.mulf %106, %114 : vector<2x8x8xf32>
    "tpu.trace_start"() <{level = 10 : i32, message = "bqk,bkd->bqd"}> : () -> ()
    %cst_45 = arith.constant dense<0.000000e+00> : vector<2x8x8xf32>
    %116 = tpu.matmul %115, %96, %cst_45 {dimension_numbers = #tpu.dot_dimension_numbers<[2], [1], [1], [2], [0, 0, 0, 1, 1, 2], [0], [0]>} : vector<2x8x8xf32>, vector<2x8x8xf32>, vector<2x8x8xf32> -> vector<2x8x8xf32>
    "tpu.trace_stop"() : () -> ()
    %117 = vector.shape_cast %116 : vector<2x8x8xf32> to vector<16x8xf32>
    %c3 = arith.constant 3 : index
    %c0_46 = arith.constant 0 : index
    %c0_47 = arith.constant 0 : index
    %118 = vector.load %arg3[%c3, %c0_46, %c0_47] : memref<4x8x32xf32, #tpu.memory_space<vmem>>, vector<1x8x32xf32>
    %119 = vector.shape_cast %118 : vector<1x8x32xf32> to vector<8x32xf32>
    %cst_48 = arith.constant dense<0.000000e+00> : vector<16x32xf32>
    %120 = tpu.matmul %117, %119, %cst_48 {dimension_numbers = #tpu.dot_dimension_numbers<[1], [0], [0], [1], [0, 0, 1, 1], [], []>} : vector<16x8xf32>, vector<8x32xf32>, vector<16x32xf32> -> vector<16x32xf32>
    %121 = arith.addf %93, %120 : vector<16x32xf32>
    %122 = arith.addf %121, %1 : vector<16x32xf32>
    %c0_49 = arith.constant 0 : index
    %c0_50 = arith.constant 0 : index
    %123 = vector.load %arg4[%c0_49, %c0_50] : memref<1x32xf32, #tpu.memory_space<vmem>>, vector<1x32xf32>
    %c0_51 = arith.constant 0 : index
    %c0_52 = arith.constant 0 : index
    %124 = vector.load %arg5[%c0_51, %c0_52] : memref<1x32xf32, #tpu.memory_space<vmem>>, vector<1x32xf32>
    %cst_53 = arith.constant dense<0.000000e+00> : vector<16xf32>
    %125 = vector.multi_reduction <add>, %122, %cst_53 [1] : vector<16x32xf32> to vector<16xf32>
    %126 = vector.shape_cast %125 : vector<16xf32> to vector<16x1xf32>
    %cst_54 = arith.constant 3.200000e+01 : f32
    %127 = vector.broadcast %cst_54 : f32 to vector<16x1xf32>
    %128 = arith.divf %126, %127 : vector<16x1xf32>
    %129 = vector.broadcast %128 : vector<16x1xf32> to vector<16x32xf32>
    %130 = arith.subf %122, %129 : vector<16x32xf32>
    %131 = arith.mulf %130, %130 : vector<16x32xf32>
    %cst_55 = arith.constant dense<0.000000e+00> : vector<16xf32>
    %132 = vector.multi_reduction <add>, %131, %cst_55 [1] : vector<16x32xf32> to vector<16xf32>
    %133 = vector.shape_cast %132 : vector<16xf32> to vector<16x1xf32>
    %cst_56 = arith.constant 3.200000e+01 : f32
    %134 = vector.broadcast %cst_56 : f32 to vector<16x1xf32>
    %135 = arith.divf %133, %134 : vector<16x1xf32>
    %136 = vector.broadcast %128 : vector<16x1xf32> to vector<16x32xf32>
    %137 = arith.subf %122, %136 : vector<16x32xf32>
    %cst_57 = arith.constant 9.99999974E-6 : f32
    %138 = vector.broadcast %cst_57 : f32 to vector<16x1xf32>
    %139 = arith.addf %135, %138 : vector<16x1xf32>
    %140 = math.rsqrt %139 : vector<16x1xf32>
    %141 = vector.broadcast %140 : vector<16x1xf32> to vector<16x32xf32>
    %142 = arith.mulf %137, %141 : vector<16x32xf32>
    %143 = vector.broadcast %123 : vector<1x32xf32> to vector<16x32xf32>
    %144 = arith.mulf %142, %143 : vector<16x32xf32>
    %145 = vector.broadcast %124 : vector<1x32xf32> to vector<16x32xf32>
    %146 = arith.addf %144, %145 : vector<16x32xf32>
    %c0_58 = arith.constant 0 : index
    %c0_59 = arith.constant 0 : index
    %147 = vector.load %arg6[%c0_58, %c0_59] : memref<32x64xf32, #tpu.memory_space<vmem>>, vector<32x64xf32>
    %cst_60 = arith.constant dense<0.000000e+00> : vector<16x64xf32>
    %148 = tpu.matmul %146, %147, %cst_60 {dimension_numbers = #tpu.dot_dimension_numbers<[1], [0], [0], [1], [0, 0, 1, 1], [], []>} : vector<16x32xf32>, vector<32x64xf32>, vector<16x64xf32> -> vector<16x64xf32>
    %c0_61 = arith.constant 0 : index
    %c0_62 = arith.constant 0 : index
    %149 = vector.load %arg7[%c0_61, %c0_62] : memref<1x64xf32, #tpu.memory_space<vmem>>, vector<1x64xf32>
    %150 = vector.broadcast %149 : vector<1x64xf32> to vector<16x64xf32>
    %151 = arith.addf %148, %150 : vector<16x64xf32>
    %cst_63 = arith.constant 0.000000e+00 : f32
    %152 = vector.broadcast %cst_63 : f32 to vector<16x64xf32>
    %153 = arith.maximumf %151, %152 : vector<16x64xf32>
    %c0_64 = arith.constant 0 : index
    %c0_65 = arith.constant 0 : index
    %154 = vector.load %arg8[%c0_64, %c0_65] : memref<64x32xf32, #tpu.memory_space<vmem>>, vector<64x32xf32>
    %cst_66 = arith.constant dense<0.000000e+00> : vector<16x32xf32>
    %155 = tpu.matmul %153, %154, %cst_66 {dimension_numbers = #tpu.dot_dimension_numbers<[1], [0], [0], [1], [0, 0, 1, 1], [], []>} : vector<16x64xf32>, vector<64x32xf32>, vector<16x32xf32> -> vector<16x32xf32>
    %c0_67 = arith.constant 0 : index
    %c0_68 = arith.constant 0 : index
    %156 = vector.load %arg9[%c0_67, %c0_68] : memref<1x32xf32, #tpu.memory_space<vmem>>, vector<1x32xf32>
    %157 = vector.broadcast %156 : vector<1x32xf32> to vector<16x32xf32>
    %158 = arith.addf %155, %157 : vector<16x32xf32>
    %159 = arith.addf %158, %146 : vector<16x32xf32>
    %c0_69 = arith.constant 0 : index
    %c0_70 = arith.constant 0 : index
    %160 = vector.load %arg10[%c0_69, %c0_70] : memref<1x32xf32, #tpu.memory_space<vmem>>, vector<1x32xf32>
    %c0_71 = arith.constant 0 : index
    %c0_72 = arith.constant 0 : index
    %161 = vector.load %arg11[%c0_71, %c0_72] : memref<1x32xf32, #tpu.memory_space<vmem>>, vector<1x32xf32>
    %cst_73 = arith.constant dense<0.000000e+00> : vector<16xf32>
    %162 = vector.multi_reduction <add>, %159, %cst_73 [1] : vector<16x32xf32> to vector<16xf32>
    %163 = vector.shape_cast %162 : vector<16xf32> to vector<16x1xf32>
    %cst_74 = arith.constant 3.200000e+01 : f32
    %164 = vector.broadcast %cst_74 : f32 to vector<16x1xf32>
    %165 = arith.divf %163, %164 : vector<16x1xf32>
    %166 = vector.broadcast %165 : vector<16x1xf32> to vector<16x32xf32>
    %167 = arith.subf %159, %166 : vector<16x32xf32>
    %168 = arith.mulf %167, %167 : vector<16x32xf32>
    %cst_75 = arith.constant dense<0.000000e+00> : vector<16xf32>
    %169 = vector.multi_reduction <add>, %168, %cst_75 [1] : vector<16x32xf32> to vector<16xf32>
    %170 = vector.shape_cast %169 : vector<16xf32> to vector<16x1xf32>
    %cst_76 = arith.constant 3.200000e+01 : f32
    %171 = vector.broadcast %cst_76 : f32 to vector<16x1xf32>
    %172 = arith.divf %170, %171 : vector<16x1xf32>
    %173 = vector.broadcast %165 : vector<16x1xf32> to vector<16x32xf32>
    %174 = arith.subf %159, %173 : vector<16x32xf32>
    %cst_77 = arith.constant 9.99999974E-6 : f32
    %175 = vector.broadcast %cst_77 : f32 to vector<16x1xf32>
    %176 = arith.addf %172, %175 : vector<16x1xf32>
    %177 = math.rsqrt %176 : vector<16x1xf32>
    %178 = vector.broadcast %177 : vector<16x1xf32> to vector<16x32xf32>
    %179 = arith.mulf %174, %178 : vector<16x32xf32>
    %180 = vector.broadcast %160 : vector<1x32xf32> to vector<16x32xf32>
    %181 = arith.mulf %179, %180 : vector<16x32xf32>
    %182 = vector.broadcast %161 : vector<1x32xf32> to vector<16x32xf32>
    %183 = arith.addf %181, %182 : vector<16x32xf32>
    %184 = vector.shape_cast %183 : vector<16x32xf32> to vector<2x8x32xf32>
    %c0_78 = arith.constant 0 : index
    %c0_79 = arith.constant 0 : index
    %c0_80 = arith.constant 0 : index
    %185 = vector.load %arg12[%c0_78, %c0_79, %c0_80] : memref<2x8x32xf32, #tpu.memory_space<vmem>>, vector<2x8x32xf32>
    tpu.vector_store %arg12[%c0_78, %c0_79, %c0_80], %184 {strides = array<i32>} : memref<2x8x32xf32, #tpu.memory_space<vmem>>, vector<2x8x32xf32>,
    return
  }
}

</mosaic_0001>

<llo_original>
// kernel: tpu_custom_call.1
$region0: #{tpu_custom_call.1}
  #allocation0 [shape = 'u32[]', space=smem, size = 0x4, offset = 0x4, fixed_abs, tag = 'smem constant byte address 0x4 - core index']
  #allocation1 [shape = 'u32[72,128]{1,0:T(1,128)}', space=vmem, size = 0x9000, scoped, tag = 'internal scratch']
  %s0 = inlined_call_operand.hbm [shape: f32[2,8,32], index: 0, kind: input, shape index: {}]
  %s1 = inlined_call_operand.vmem [shape: s32[2,1,1], index: 1, kind: input, shape index: {}]
  %s2 = inlined_call_operand.vmem [shape: f32[32,96], index: 2, kind: input, shape index: {}]
  %s3 = inlined_call_operand.vmem [shape: f32[4,8,32], index: 3, kind: input, shape index: {}]
  %s4 = inlined_call_operand.vmem [shape: f32[1,32], index: 4, kind: input, shape index: {}]
  %s5 = inlined_call_operand.vmem [shape: f32[1,32], index: 5, kind: input, shape index: {}]
  %s6 = inlined_call_operand.vmem [shape: f32[32,64], index: 6, kind: input, shape index: {}]
  %s7 = inlined_call_operand.vmem [shape: f32[1,64], index: 7, kind: input, shape index: {}]
  %s8 = inlined_call_operand.vmem [shape: f32[64,32], index: 8, kind: input, shape index: {}]
  %s9 = inlined_call_operand.vmem [shape: f32[1,32], index: 9, kind: input, shape index: {}]
  %s10 = inlined_call_operand.vmem [shape: f32[1,32], index: 10, kind: input, shape index: {}]
  %s11 = inlined_call_operand.vmem [shape: f32[1,32], index: 11, kind: input, shape index: {}]
  %s12 = inlined_call_operand.hbm [shape: f32[2,8,32], index: 12, kind: output, shape index: {}]
  %s13 = sld [smem:[#allocation0]]
  $region62: #{tpu_custom_call.1} parent=0
    _
  %s15 = ssub.s32 1, %s13
  %s16 = scalar_select 0, %s15, %s13
  $region1: #{tpu_custom_call.1} parent=0
    #allocation2 [shape = 'u8[8192]{0}', space=vmem, size = 0x2000, scoped, tag = 'input window, operand 0, single buffered']
    #allocation3 [shape = 's32[1]{0}', space=sflag, size = 0x4, scoped, tag = 'scoped memory for tpu_custom_call.1']
    #allocation4 [shape = 's32[1]{0}', space=sflag, size = 0x4, scoped, tag = 'scoped memory for tpu_custom_call.1']
    #allocation5 [shape = 'u8[8192]{0}', space=vmem, size = 0x2000, scoped, tag = 'output window, operand 0, single buffered']
    %17 = vsyncpa [#allocation3], 0
    %18 = vsyncpa [#allocation4], 0
    // Predicated region
    $region2: #{tpu_custom_call.1} parent=1 // pred_check
      _
    $region3: #{tpu_custom_call.1} parent=1 // pred_check_branch
      %20 = sbr.rel (0) target = $region5
    $region4: #{tpu_custom_call.1} parent=1 // pred_region
      %22 = vsyncadd [#allocation3], 0
      %s23 = sshll.u32 %s0, 4
      %s24 = int_to_ptr.hbm [resolvable:$true] %s23
      %s25 = sshll.u32 [#allocation2], 4
      %s26 = int_to_ptr.vmem [resolvable:$true] %s25
      %31 = dma.hbm_to_vmem [thread:$0]  %s24, 256, %s26, [#allocation3], 128, 128, 8
    $region5: #{tpu_custom_call.1} parent=1 // pred_fallthru
      _
    // Predicated region
    $region6: #{tpu_custom_call.1} parent=1 // pred_check
      _
    $region7: #{tpu_custom_call.1} parent=1 // pred_check_branch
      %33 = sbr.rel (0) target = $region9
    $region8: #{tpu_custom_call.1} parent=1 // pred_region
      _
    $region9: #{tpu_custom_call.1} parent=1 // pred_fallthru
      _
    // Predicated region
    $region10: #{tpu_custom_call.1} parent=1 // pred_check
      _
    $region11: #{tpu_custom_call.1} parent=1 // pred_check_branch
      %35 = sbr.rel (0) target = $region13
    $region12: #{tpu_custom_call.1} parent=1 // pred_region
      _
    $region13: #{tpu_custom_call.1} parent=1 // pred_fallthru
      _
    // Predicated region
    $region14: #{tpu_custom_call.1} parent=1 // pred_check
      _
    $region15: #{tpu_custom_call.1} parent=1 // pred_check_branch
      %37 = sbr.rel (0) target = $region17
    $region16: #{tpu_custom_call.1} parent=1 // pred_region
      _
    $region17: #{tpu_custom_call.1} parent=1 // pred_fallthru
      _
    // Predicated region
    $region18: #{tpu_custom_call.1} parent=1 // pred_check
      _
    $region19: #{tpu_custom_call.1} parent=1 // pred_check_branch
      %39 = sbr.rel (0) target = $region21
    $region20: #{tpu_custom_call.1} parent=1 // pred_region
      _
    $region21: #{tpu_custom_call.1} parent=1 // pred_fallthru
      _
    // Predicated region
    $region22: #{tpu_custom_call.1} parent=1 // pred_check
      _
    $region23: #{tpu_custom_call.1} parent=1 // pred_check_branch
      %41 = sbr.rel (0) target = $region25
    $region24: #{tpu_custom_call.1} parent=1 // pred_region
      _
    $region25: #{tpu_custom_call.1} parent=1 // pred_fallthru
      _
    // Predicated region
    $region26: #{tpu_custom_call.1} parent=1 // pred_check
      _
    $region27: #{tpu_custom_call.1} parent=1 // pred_check_branch
      %43 = sbr.rel (0) target = $region29
    $region28: #{tpu_custom_call.1} parent=1 // pred_region
      _
    $region29: #{tpu_custom_call.1} parent=1 // pred_fallthru
      _
    // Predicated region
    $region30: #{tpu_custom_call.1} parent=1 // pred_check
      _
    $region31: #{tpu_custom_call.1} parent=1 // pred_check_branch
      %45 = sbr.rel (0) target = $region33
    $region32: #{tpu_custom_call.1} parent=1 // pred_region
      _
    $region33: #{tpu_custom_call.1} parent=1 // pred_fallthru
      _
    // Predicated region
    $region34: #{tpu_custom_call.1} parent=1 // pred_check
      _
    $region35: #{tpu_custom_call.1} parent=1 // pred_check_branch
      %47 = sbr.rel (0) target = $region37
    $region36: #{tpu_custom_call.1} parent=1 // pred_region
      _
    $region37: #{tpu_custom_call.1} parent=1 // pred_fallthru
      _
    // Predicated region
    $region38: #{tpu_custom_call.1} parent=1 // pred_check
      _
    $region39: #{tpu_custom_call.1} parent=1 // pred_check_branch
      %49 = sbr.rel (0) target = $region41
    $region40: #{tpu_custom_call.1} parent=1 // pred_region
      _
    $region41: #{tpu_custom_call.1} parent=1 // pred_fallthru
      _
    // Predicated region
    $region42: #{tpu_custom_call.1} parent=1 // pred_check
      _
    $region43: #{tpu_custom_call.1} parent=1 // pred_check_branch
      %51 = sbr.rel (0) target = $region45
    $region44: #{tpu_custom_call.1} parent=1 // pred_region
      _
    $region45: #{tpu_custom_call.1} parent=1 // pred_fallthru
      _
    // Predicated region
    $region46: #{tpu_custom_call.1} parent=1 // pred_check
      _
    $region47: #{tpu_custom_call.1} parent=1 // pred_check_branch
      %53 = sbr.rel (0) target = $region49
    $region48: #{tpu_custom_call.1} parent=1 // pred_region
      _
    $region49: #{tpu_custom_call.1} parent=1 // pred_fallthru
      _
    // Predicated region
    $region50: #{tpu_custom_call.1} parent=1 // pred_check
      _
    $region51: #{tpu_custom_call.1} parent=1 // pred_check_branch
      %55 = sbr.rel (0) target = $region53
    $region52: #{tpu_custom_call.1} parent=1 // pred_region
      %57 = dma.done [#allocation3], 256
    $region53: #{tpu_custom_call.1} parent=1 // pred_fallthru
      _
    %v58 = vld [vmem:[#allocation2] sm:$0xff]
    %v59 = vld [vmem:[#allocation2 + $0x8] sm:$0xff]
    %v60 = vld [vmem:[%s2] sm:$0xff]
    %v61 = vld [vmem:[%s2 + $0x8] sm:$0xff]
    %v62 = vld [vmem:[%s2 + $0x10] sm:$0xff]
    %v63 = vld [vmem:[%s2 + $0x18] sm:$0xff]
    %vm64 = vcmask 261120
    %v66 = vsel %vm64, %v58, 0
    %v69 = vsel %vm64, %v59, 0
    %71 = vmatpush.msra.mxu0 0.0
    %72 = vmatpush.msra.mxu0 0.0
    %73 = vmatpush.msra.mxu0 0.0
    %74 = vmatpush.msra.mxu0 0.0
    %75 = vmatpush.msra.mxu0 0.0
    %76 = vmatpush.msra.mxu0 0.0
    %77 = vmatpush.msra.mxu0 0.0
    %78 = vmatpush.msra.mxu0 0.0
    %79 = vmatpush.msra.mxu0 0.0
    %80 = vmatpush.msra.mxu0 0.0
    %81 = vmatpush.msra.mxu0 0.0
    %82 = vmatpush.msra.mxu0 0.0
    %83 = vmatpush.msra.mxu0 %v63
    %84 = vmatpush.msra.mxu0 %v62
    %85 = vmatpush.msra.mxu0 %v61
    %86 = vmatpush.msra.mxu0 %v60
    %87 = vmatmul.f32.gmra.mxu0 %v66
    %v88 = vpop.f32.mrf.mxu0
    %v89 = vadd.f32 0.0, %v88
    %90 = vmatmul.f32.gmra.mxu0 %v69
    %v91 = vpop.f32.mrf.mxu0
    %v92 = vadd.f32 0.0, %v91
    %93 = vdwg.mxu0
    %v94 = vlaneseq
    %v95 = vand.u32 %v94, 127
    %v96 = vld [vmem:[%s1] sm:$0x1]
    %v97 = vld [vmem:[%s1 + $0x1] sm:$0x1]
    %v98 = vperm.slane %v96, 0
    %v99 = vperm.slane %v97, 0
    %100 = vset.pattern.permute.xlu0 0
    %101 = vperm.xlu0 %100, %v98
    %v102 = vpop.permute.xlu0 %101
    %103 = vset.pattern.permute.xlu0 0
    %104 = vperm.xlu0 %103, %v99
    %v105 = vpop.permute.xlu0 %104
    %vm106 = vcmp.lt.s32.totalorder %v95, %v102
    %vm107 = vcmp.lt.s32.totalorder %v95, %v105
    %109 = vrot.lane.b32.xlu0 %v89, 96
    %v110 = vpop.permute.xlu0 %109
    %vm111 = vcmask 64512
    %v112 = vsel %vm111, %v89, 0
    %v114 = vsel %vm111, %v110, 0
    %116 = vmatpush.xpose.msra.mxu0 0.0
    %117 = vmatpush.xpose.msra.mxu0 0.0
    %118 = vmatpush.xpose.msra.mxu0 0.0
    %119 = vmatpush.xpose.msra.mxu0 0.0
    %120 = vmatpush.xpose.msra.mxu0 0.0
    %121 = vmatpush.xpose.msra.mxu0 0.0
    %122 = vmatpush.xpose.msra.mxu0 0.0
    %123 = vmatpush.xpose.msra.mxu0 0.0
    %124 = vmatpush.xpose.msra.mxu0 0.0
    %125 = vmatpush.xpose.msra.mxu0 0.0
    %126 = vmatpush.xpose.msra.mxu0 0.0
    %127 = vmatpush.xpose.msra.mxu0 0.0
    %128 = vmatpush.xpose.msra.mxu0 0.0
    %129 = vmatpush.xpose.msra.mxu0 0.0
    %130 = vmatpush.xpose.msra.mxu0 0.0
    %131 = vmatpush.xpose.msra.mxu0 %v114
    %132 = vmatmul.f32.gmra.mxu0 %v112
    %v133 = vpop.f32.mrf.mxu0
    %v134 = vadd.f32 0.0, %v133
    %135 = vdwg.mxu0
    %137 = vrot.lane.b32.xlu0 %v92, 96
    %v138 = vpop.permute.xlu0 %137
    %v139 = vsel %vm111, %v92, 0
    %v141 = vsel %vm111, %v138, 0
    %143 = vmatpush.xpose.msra.mxu0 0.0
    %144 = vmatpush.xpose.msra.mxu0 0.0
    %145 = vmatpush.xpose.msra.mxu0 0.0
    %146 = vmatpush.xpose.msra.mxu0 0.0
    %147 = vmatpush.xpose.msra.mxu0 0.0
    %148 = vmatpush.xpose.msra.mxu0 0.0
    %149 = vmatpush.xpose.msra.mxu0 0.0
    %150 = vmatpush.xpose.msra.mxu0 0.0
    %151 = vmatpush.xpose.msra.mxu0 0.0
    %152 = vmatpush.xpose.msra.mxu0 0.0
    %153 = vmatpush.xpose.msra.mxu0 0.0
    %154 = vmatpush.xpose.msra.mxu0 0.0
    %155 = vmatpush.xpose.msra.mxu0 0.0
    %156 = vmatpush.xpose.msra.mxu0 0.0
    %157 = vmatpush.xpose.msra.mxu0 0.0
    %158 = vmatpush.xpose.msra.mxu0 %v141
    %159 = vmatmul.f32.gmra.mxu0 %v139
    %v160 = vpop.f32.mrf.mxu0
    %v161 = vadd.f32 0.0, %v160
    %162 = vdwg.mxu0
    %v163 = vmul.f32 %v134, 0.35355338
    %v164 = vmul.f32 %v161, 0.35355338
    %v165 = vsel %vm106, %v163, -1000000.0
    %v166 = vsel %vm107, %v164, -1000000.0
    %v167 = vsel %vm111, %v165, -inf
    %168 = vmax.xlane.f32.xlu0 %v167
    %v169 = vpop.xlane.xlu0 %168
    %v170 = vsel %vm111, %v166, -inf
    %171 = vmax.xlane.f32.xlu0 %v170
    %v172 = vpop.xlane.xlu0 %171
    %v173 = vsub.f32 %v165, %v169
    %v174 = vsub.f32 %v166, %v172
    %v175 = vmul.f32 %v173, 1.442695
    %v176 = vpow.pop %v175
    %v177 = vmul.f32 %v174, 1.442695
    %v178 = vpow.pop %v177
    %v179 = vsel %vm111, %v176, 0.0
    %180 = vadd.xlane.f32.xlu0 %v179
    %v181 = vpop.xlane.xlu0 %180
    %v182 = vsel %vm111, %v178, 0.0
    %183 = vadd.xlane.f32.xlu0 %v182
    %v184 = vpop.xlane.xlu0 %183
    %v185 = vrcp.pop %v181
    %v186 = vrcp.pop %v184
    %v187 = vmul.f32 %v181, %v185
    %v188 = vmul.f32 %v184, %v186
    %v189 = vsub.f32 2.0, %v187
    %v190 = vsub.f32 2.0, %v188
    %v191 = vmul.f32 %v185, %v189
    %v192 = vmul.f32 %v186, %v190
    %v193 = vmul.f32 %v176, %v191
    %v194 = vmul.f32 %v178, %v192
    %195 = vrot.lane.b32.xlu0 %v89, 64
    %v196 = vpop.permute.xlu0 %195
    %v199 = vsel %vm111, %v193, 0
    %201 = vmatpush.msra.mxu0 0.0
    %202 = vmatpush.msra.mxu0 0.0
    %203 = vmatpush.msra.mxu0 0.0
    %204 = vmatpush.msra.mxu0 0.0
    %205 = vmatpush.msra.mxu0 0.0
    %206 = vmatpush.msra.mxu0 0.0
    %207 = vmatpush.msra.mxu0 0.0
    %208 = vmatpush.msra.mxu0 0.0
    %209 = vmatpush.msra.mxu0 0.0
    %210 = vmatpush.msra.mxu0 0.0
    %211 = vmatpush.msra.mxu0 0.0
    %212 = vmatpush.msra.mxu0 0.0
    %213 = vmatpush.msra.mxu0 0.0
    %214 = vmatpush.msra.mxu0 0.0
    %215 = vmatpush.msra.mxu0 0.0
    %216 = vmatpush.msra.mxu0 %v196
    %217 = vmatmul.f32.gmra.mxu0 %v199
    %v218 = vpop.f32.mrf.mxu0
    %v219 = vadd.f32 0.0, %v218
    %220 = vdwg.mxu0
    %221 = vrot.lane.b32.xlu0 %v92, 64
    %v222 = vpop.permute.xlu0 %221
    %v225 = vsel %vm111, %v194, 0
    %227 = vmatpush.msra.mxu0 0.0
    %228 = vmatpush.msra.mxu0 0.0
    %229 = vmatpush.msra.mxu0 0.0
    %230 = vmatpush.msra.mxu0 0.0
    %231 = vmatpush.msra.mxu0 0.0
    %232 = vmatpush.msra.mxu0 0.0
    %233 = vmatpush.msra.mxu0 0.0
    %234 = vmatpush.msra.mxu0 0.0
    %235 = vmatpush.msra.mxu0 0.0
    %236 = vmatpush.msra.mxu0 0.0
    %237 = vmatpush.msra.mxu0 0.0
    %238 = vmatpush.msra.mxu0 0.0
    %239 = vmatpush.msra.mxu0 0.0
    %240 = vmatpush.msra.mxu0 0.0
    %241 = vmatpush.msra.mxu0 0.0
    %242 = vmatpush.msra.mxu0 %v222
    %243 = vmatmul.f32.gmra.mxu0 %v225
    %v244 = vpop.f32.mrf.mxu0
    %v245 = vadd.f32 0.0, %v244
    %246 = vdwg.mxu0
    %v247 = vld [vmem:[%s3] sm:$0xff]
    %248 = vrot.lane.b32.xlu0 %v89, 120
    %v249 = vpop.permute.xlu0 %248
    %250 = vrot.lane.b32.xlu0 %v89, 88
    %v251 = vpop.permute.xlu0 %250
    %v252 = vsel %vm111, %v249, 0
    %v254 = vsel %vm111, %v251, 0
    %256 = vmatpush.xpose.msra.mxu0 0.0
    %257 = vmatpush.xpose.msra.mxu0 0.0
    %258 = vmatpush.xpose.msra.mxu0 0.0
    %259 = vmatpush.xpose.msra.mxu0 0.0
    %260 = vmatpush.xpose.msra.mxu0 0.0
    %261 = vmatpush.xpose.msra.mxu0 0.0
    %262 = vmatpush.xpose.msra.mxu0 0.0
    %263 = vmatpush.xpose.msra.mxu0 0.0
    %264 = vmatpush.xpose.msra.mxu0 0.0
    %265 = vmatpush.xpose.msra.mxu0 0.0
    %266 = vmatpush.xpose.msra.mxu0 0.0
    %267 = vmatpush.xpose.msra.mxu0 0.0
    %268 = vmatpush.xpose.msra.mxu0 0.0
    %269 = vmatpush.xpose.msra.mxu0 0.0
    %270 = vmatpush.xpose.msra.mxu0 0.0
    %271 = vmatpush.xpose.msra.mxu0 %v254
    %272 = vmatmul.f32.gmra.mxu0 %v252
    %v273 = vpop.f32.mrf.mxu0
    %v274 = vadd.f32 0.0, %v273
    %275 = vdwg.mxu0
    %276 = vrot.lane.b32.xlu0 %v92, 120
    %v277 = vpop.permute.xlu0 %276
    %278 = vrot.lane.b32.xlu0 %v92, 88
    %v279 = vpop.permute.xlu0 %278
    %v280 = vsel %vm111, %v277, 0
    %v282 = vsel %vm111, %v279, 0
    %284 = vmatpush.xpose.msra.mxu0 0.0
    %285 = vmatpush.xpose.msra.mxu0 0.0
    %286 = vmatpush.xpose.msra.mxu0 0.0
    %287 = vmatpush.xpose.msra.mxu0 0.0
    %288 = vmatpush.xpose.msra.mxu0 0.0
    %289 = vmatpush.xpose.msra.mxu0 0.0
    %290 = vmatpush.xpose.msra.mxu0 0.0
    %291 = vmatpush.xpose.msra.mxu0 0.0
    %292 = vmatpush.xpose.msra.mxu0 0.0
    %293 = vmatpush.xpose.msra.mxu0 0.0
    %294 = vmatpush.xpose.msra.mxu0 0.0
    %295 = vmatpush.xpose.msra.mxu0 0.0
    %296 = vmatpush.xpose.msra.mxu0 0.0
    %297 = vmatpush.xpose.msra.mxu0 0.0
    %298 = vmatpush.xpose.msra.mxu0 0.0
    %299 = vmatpush.xpose.msra.mxu0 %v282
    %300 = vmatmul.f32.gmra.mxu0 %v280
    %v301 = vpop.f32.mrf.mxu0
    %v302 = vadd.f32 0.0, %v301
    %303 = vdwg.mxu0
    %v304 = vmul.f32 %v274, 0.35355338
    %v305 = vmul.f32 %v302, 0.35355338
    %v306 = vsel %vm106, %v304, -1000000.0
    %v307 = vsel %vm107, %v305, -1000000.0
    %v308 = vsel %vm111, %v306, -inf
    %309 = vmax.xlane.f32.xlu0 %v308
    %v310 = vpop.xlane.xlu0 %309
    %v311 = vsel %vm111, %v307, -inf
    %312 = vmax.xlane.f32.xlu0 %v311
    %v313 = vpop.xlane.xlu0 %312
    %v314 = vsub.f32 %v306, %v310
    %v315 = vsub.f32 %v307, %v313
    %v316 = vmul.f32 %v314, 1.442695
    %v317 = vpow.pop %v316
    %v318 = vmul.f32 %v315, 1.442695
    %v319 = vpow.pop %v318
    %v320 = vsel %vm111, %v317, 0.0
    %321 = vadd.xlane.f32.xlu0 %v320
    %v322 = vpop.xlane.xlu0 %321
    %v323 = vsel %vm111, %v319, 0.0
    %324 = vadd.xlane.f32.xlu0 %v323
    %v325 = vpop.xlane.xlu0 %324
    %v326 = vrcp.pop %v322
    %v327 = vrcp.pop %v325
    %v328 = vmul.f32 %v322, %v326
    %v329 = vmul.f32 %v325, %v327
    %v330 = vsub.f32 2.0, %v328
    %v331 = vsub.f32 2.0, %v329
    %v332 = vmul.f32 %v326, %v330
    %v333 = vmul.f32 %v327, %v331
    %v334 = vmul.f32 %v317, %v332
    %v335 = vmul.f32 %v319, %v333
    %336 = vrot.lane.b32.xlu0 %v89, 56
    %v337 = vpop.permute.xlu0 %336
    %v340 = vsel %vm111, %v334, 0
    %342 = vmatpush.msra.mxu0 0.0
    %343 = vmatpush.msra.mxu0 0.0
    %344 = vmatpush.msra.mxu0 0.0
    %345 = vmatpush.msra.mxu0 0.0
    %346 = vmatpush.msra.mxu0 0.0
    %347 = vmatpush.msra.mxu0 0.0
    %348 = vmatpush.msra.mxu0 0.0
    %349 = vmatpush.msra.mxu0 0.0
    %350 = vmatpush.msra.mxu0 0.0
    %351 = vmatpush.msra.mxu0 0.0
    %352 = vmatpush.msra.mxu0 0.0
    %353 = vmatpush.msra.mxu0 0.0
    %354 = vmatpush.msra.mxu0 0.0
    %355 = vmatpush.msra.mxu0 0.0
    %356 = vmatpush.msra.mxu0 0.0
    %357 = vmatpush.msra.mxu0 %v337
    %358 = vmatmul.f32.gmra.mxu0 %v340
    %v359 = vpop.f32.mrf.mxu0
    %v360 = vadd.f32 0.0, %v359
    %361 = vdwg.mxu0
    %362 = vrot.lane.b32.xlu0 %v92, 56
    %v363 = vpop.permute.xlu0 %362
    %v366 = vsel %vm111, %v335, 0
    %368 = vmatpush.msra.mxu0 0.0
    %369 = vmatpush.msra.mxu0 0.0
    %370 = vmatpush.msra.mxu0 0.0
    %371 = vmatpush.msra.mxu0 0.0
    %372 = vmatpush.msra.mxu0 0.0
    %373 = vmatpush.msra.mxu0 0.0
    %374 = vmatpush.msra.mxu0 0.0
    %375 = vmatpush.msra.mxu0 0.0
    %376 = vmatpush.msra.mxu0 0.0
    %377 = vmatpush.msra.mxu0 0.0
    %378 = vmatpush.msra.mxu0 0.0
    %379 = vmatpush.msra.mxu0 0.0
    %380 = vmatpush.msra.mxu0 0.0
    %381 = vmatpush.msra.mxu0 0.0
    %382 = vmatpush.msra.mxu0 0.0
    %383 = vmatpush.msra.mxu0 %v363
    %384 = vmatmul.f32.gmra.mxu0 %v366
    %v385 = vpop.f32.mrf.mxu0
    %v386 = vadd.f32 0.0, %v385
    %387 = vdwg.mxu0
    %s388 = scalar_lea.vmem %s3, 8
    %v389 = vld [vmem:[%s388] sm:$0xff]
    %v391 = vsel %vm111, %v360, 0
    %v394 = vsel %vm111, %v386, 0
    %396 = vmatpush.msra.mxu0 0.0
    %397 = vmatpush.msra.mxu0 0.0
    %398 = vmatpush.msra.mxu0 0.0
    %399 = vmatpush.msra.mxu0 0.0
    %400 = vmatpush.msra.mxu0 0.0
    %401 = vmatpush.msra.mxu0 0.0
    %402 = vmatpush.msra.mxu0 0.0
    %403 = vmatpush.msra.mxu0 0.0
    %404 = vmatpush.msra.mxu0 0.0
    %405 = vmatpush.msra.mxu0 0.0
    %406 = vmatpush.msra.mxu0 0.0
    %407 = vmatpush.msra.mxu0 0.0
    %408 = vmatpush.msra.mxu0 0.0
    %409 = vmatpush.msra.mxu0 0.0
    %410 = vmatpush.msra.mxu0 0.0
    %411 = vmatpush.msra.mxu0 %v389
    %412 = vmatmul.f32.gmra.mxu0 %v391
    %v413 = vpop.f32.mrf.mxu0
    %v414 = vadd.f32 0.0, %v413
    %415 = vmatmul.f32.gmra.mxu0 %v394
    %v416 = vpop.f32.mrf.mxu0
    %v417 = vadd.f32 0.0, %v416
    %418 = vdwg.mxu0
    %v420 = vsel %vm111, %v219, 0
    %v423 = vsel %vm111, %v245, 0
    %425 = vmatpush.msra.mxu0 0.0
    %426 = vmatpush.msra.mxu0 0.0
    %427 = vmatpush.msra.mxu0 0.0
    %428 = vmatpush.msra.mxu0 0.0
    %429 = vmatpush.msra.mxu0 0.0
    %430 = vmatpush.msra.mxu0 0.0
    %431 = vmatpush.msra.mxu0 0.0
    %432 = vmatpush.msra.mxu0 0.0
    %433 = vmatpush.msra.mxu0 0.0
    %434 = vmatpush.msra.mxu0 0.0
    %435 = vmatpush.msra.mxu0 0.0
    %436 = vmatpush.msra.mxu0 0.0
    %437 = vmatpush.msra.mxu0 0.0
    %438 = vmatpush.msra.mxu0 0.0
    %439 = vmatpush.msra.mxu0 0.0
    %440 = vmatpush.msra.mxu0 %v247
    %441 = vmatmul.f32.gmra.mxu0 %v420
    %v442 = vpop.f32.mrf.mxu0
    %v443 = vadd.f32 %v414, %v442
    %444 = vmatmul.f32.gmra.mxu0 %v423
    %v445 = vpop.f32.mrf.mxu0
    %v446 = vadd.f32 %v417, %v445
    %447 = vdwg.mxu0
    %448 = vrot.lane.b32.xlu0 %v89, 112
    %v449 = vpop.permute.xlu0 %448
    %450 = vrot.lane.b32.xlu0 %v89, 80
    %v451 = vpop.permute.xlu0 %450
    %v452 = vsel %vm111, %v449, 0
    %v454 = vsel %vm111, %v451, 0
    %456 = vmatpush.xpose.msra.mxu0 0.0
    %457 = vmatpush.xpose.msra.mxu0 0.0
    %458 = vmatpush.xpose.msra.mxu0 0.0
    %459 = vmatpush.xpose.msra.mxu0 0.0
    %460 = vmatpush.xpose.msra.mxu0 0.0
    %461 = vmatpush.xpose.msra.mxu0 0.0
    %462 = vmatpush.xpose.msra.mxu0 0.0
    %463 = vmatpush.xpose.msra.mxu0 0.0
    %464 = vmatpush.xpose.msra.mxu0 0.0
    %465 = vmatpush.xpose.msra.mxu0 0.0
    %466 = vmatpush.xpose.msra.mxu0 0.0
    %467 = vmatpush.xpose.msra.mxu0 0.0
    %468 = vmatpush.xpose.msra.mxu0 0.0
    %469 = vmatpush.xpose.msra.mxu0 0.0
    %470 = vmatpush.xpose.msra.mxu0 0.0
    %471 = vmatpush.xpose.msra.mxu0 %v454
    %472 = vmatmul.f32.gmra.mxu0 %v452
    %v473 = vpop.f32.mrf.mxu0
    %v474 = vadd.f32 0.0, %v473
    %475 = vdwg.mxu0
    %476 = vrot.lane.b32.xlu0 %v92, 112
    %v477 = vpop.permute.xlu0 %476
    %478 = vrot.lane.b32.xlu0 %v92, 80
    %v479 = vpop.permute.xlu0 %478
    %v480 = vsel %vm111, %v477, 0
    %v482 = vsel %vm111, %v479, 0
    %484 = vmatpush.xpose.msra.mxu0 0.0
    %485 = vmatpush.xpose.msra.mxu0 0.0
    %486 = vmatpush.xpose.msra.mxu0 0.0
    %487 = vmatpush.xpose.msra.mxu0 0.0
    %488 = vmatpush.xpose.msra.mxu0 0.0
    %489 = vmatpush.xpose.msra.mxu0 0.0
    %490 = vmatpush.xpose.msra.mxu0 0.0
    %491 = vmatpush.xpose.msra.mxu0 0.0
    %492 = vmatpush.xpose.msra.mxu0 0.0
    %493 = vmatpush.xpose.msra.mxu0 0.0
    %494 = vmatpush.xpose.msra.mxu0 0.0
    %495 = vmatpush.xpose.msra.mxu0 0.0
    %496 = vmatpush.xpose.msra.mxu0 0.0
    %497 = vmatpush.xpose.msra.mxu0 0.0
    %498 = vmatpush.xpose.msra.mxu0 0.0
    %499 = vmatpush.xpose.msra.mxu0 %v482
    %500 = vmatmul.f32.gmra.mxu0 %v480
    %v501 = vpop.f32.mrf.mxu0
    %v502 = vadd.f32 0.0, %v501
    %503 = vdwg.mxu0
    %v504 = vmul.f32 %v474, 0.35355338
    %v505 = vmul.f32 %v502, 0.35355338
    %v506 = vsel %vm106, %v504, -1000000.0
    %v507 = vsel %vm107, %v505, -1000000.0
    %v508 = vsel %vm111, %v506, -inf
    %509 = vmax.xlane.f32.xlu0 %v508
    %v510 = vpop.xlane.xlu0 %509
    %v511 = vsel %vm111, %v507, -inf
    %512 = vmax.xlane.f32.xlu0 %v511
    %v513 = vpop.xlane.xlu0 %512
    %v514 = vsub.f32 %v506, %v510
    %v515 = vsub.f32 %v507, %v513
    %v516 = vmul.f32 %v514, 1.442695
    %v517 = vpow.pop %v516
    %v518 = vmul.f32 %v515, 1.442695
    %v519 = vpow.pop %v518
    %v520 = vsel %vm111, %v517, 0.0
    %521 = vadd.xlane.f32.xlu0 %v520
    %v522 = vpop.xlane.xlu0 %521
    %v523 = vsel %vm111, %v519, 0.0
    %524 = vadd.xlane.f32.xlu0 %v523
    %v525 = vpop.xlane.xlu0 %524
    %v526 = vrcp.pop %v522
    %v527 = vrcp.pop %v525
    %v528 = vmul.f32 %v522, %v526
    %v529 = vmul.f32 %v525, %v527
    %v530 = vsub.f32 2.0, %v528
    %v531 = vsub.f32 2.0, %v529
    %v532 = vmul.f32 %v526, %v530
    %v533 = vmul.f32 %v527, %v531
    %v534 = vmul.f32 %v517, %v532
    %v535 = vmul.f32 %v519, %v533
    %536 = vrot.lane.b32.xlu0 %v89, 48
    %v537 = vpop.permute.xlu0 %536
    %v540 = vsel %vm111, %v534, 0
    %542 = vmatpush.msra.mxu0 0.0
    %543 = vmatpush.msra.mxu0 0.0
    %544 = vmatpush.msra.mxu0 0.0
    %545 = vmatpush.msra.mxu0 0.0
    %546 = vmatpush.msra.mxu0 0.0
    %547 = vmatpush.msra.mxu0 0.0
    %548 = vmatpush.msra.mxu0 0.0
    %549 = vmatpush.msra.mxu0 0.0
    %550 = vmatpush.msra.mxu0 0.0
    %551 = vmatpush.msra.mxu0 0.0
    %552 = vmatpush.msra.mxu0 0.0
    %553 = vmatpush.msra.mxu0 0.0
    %554 = vmatpush.msra.mxu0 0.0
    %555 = vmatpush.msra.mxu0 0.0
    %556 = vmatpush.msra.mxu0 0.0
    %557 = vmatpush.msra.mxu0 %v537
    %558 = vmatmul.f32.gmra.mxu0 %v540
    %v559 = vpop.f32.mrf.mxu0
    %v560 = vadd.f32 0.0, %v559
    %561 = vdwg.mxu0
    %562 = vrot.lane.b32.xlu0 %v92, 48
    %v563 = vpop.permute.xlu0 %562
    %v566 = vsel %vm111, %v535, 0
    %568 = vmatpush.msra.mxu0 0.0
    %569 = vmatpush.msra.mxu0 0.0
    %570 = vmatpush.msra.mxu0 0.0
    %571 = vmatpush.msra.mxu0 0.0
    %572 = vmatpush.msra.mxu0 0.0
    %573 = vmatpush.msra.mxu0 0.0
    %574 = vmatpush.msra.mxu0 0.0
    %575 = vmatpush.msra.mxu0 0.0
    %576 = vmatpush.msra.mxu0 0.0
    %577 = vmatpush.msra.mxu0 0.0
    %578 = vmatpush.msra.mxu0 0.0
    %579 = vmatpush.msra.mxu0 0.0
    %580 = vmatpush.msra.mxu0 0.0
    %581 = vmatpush.msra.mxu0 0.0
    %582 = vmatpush.msra.mxu0 0.0
    %583 = vmatpush.msra.mxu0 %v563
    %584 = vmatmul.f32.gmra.mxu0 %v566
    %v585 = vpop.f32.mrf.mxu0
    %v586 = vadd.f32 0.0, %v585
    %587 = vdwg.mxu0
    %s588 = scalar_lea.vmem %s3, 16
    %v589 = vld [vmem:[%s588] sm:$0xff]
    %v591 = vsel %vm111, %v560, 0
    %v594 = vsel %vm111, %v586, 0
    %596 = vmatpush.msra.mxu0 0.0
    %597 = vmatpush.msra.mxu0 0.0
    %598 = vmatpush.msra.mxu0 0.0
    %599 = vmatpush.msra.mxu0 0.0
    %600 = vmatpush.msra.mxu0 0.0
    %601 = vmatpush.msra.mxu0 0.0
    %602 = vmatpush.msra.mxu0 0.0
    %603 = vmatpush.msra.mxu0 0.0
    %604 = vmatpush.msra.mxu0 0.0
    %605 = vmatpush.msra.mxu0 0.0
    %606 = vmatpush.msra.mxu0 0.0
    %607 = vmatpush.msra.mxu0 0.0
    %608 = vmatpush.msra.mxu0 0.0
    %609 = vmatpush.msra.mxu0 0.0
    %610 = vmatpush.msra.mxu0 0.0
    %611 = vmatpush.msra.mxu0 %v589
    %612 = vmatmul.f32.gmra.mxu0 %v591
    %v613 = vpop.f32.mrf.mxu0
    %v614 = vadd.f32 0.0, %v613
    %615 = vmatmul.f32.gmra.mxu0 %v594
    %v616 = vpop.f32.mrf.mxu0
    %v617 = vadd.f32 0.0, %v616
    %618 = vdwg.mxu0
    %v619 = vadd.f32 %v443, %v614
    %v620 = vadd.f32 %v446, %v617
    %621 = vrot.lane.b32.xlu0 %v89, 104
    %v622 = vpop.permute.xlu0 %621
    %623 = vrot.lane.b32.xlu0 %v89, 72
    %v624 = vpop.permute.xlu0 %623
    %v625 = vsel %vm111, %v622, 0
    %v627 = vsel %vm111, %v624, 0
    %629 = vmatpush.xpose.msra.mxu0 0.0
    %630 = vmatpush.xpose.msra.mxu0 0.0
    %631 = vmatpush.xpose.msra.mxu0 0.0
    %632 = vmatpush.xpose.msra.mxu0 0.0
    %633 = vmatpush.xpose.msra.mxu0 0.0
    %634 = vmatpush.xpose.msra.mxu0 0.0
    %635 = vmatpush.xpose.msra.mxu0 0.0
    %636 = vmatpush.xpose.msra.mxu0 0.0
    %637 = vmatpush.xpose.msra.mxu0 0.0
    %638 = vmatpush.xpose.msra.mxu0 0.0
    %639 = vmatpush.xpose.msra.mxu0 0.0
    %640 = vmatpush.xpose.msra.mxu0 0.0
    %641 = vmatpush.xpose.msra.mxu0 0.0
    %642 = vmatpush.xpose.msra.mxu0 0.0
    %643 = vmatpush.xpose.msra.mxu0 0.0
    %644 = vmatpush.xpose.msra.mxu0 %v627
    %645 = vmatmul.f32.gmra.mxu0 %v625
    %v646 = vpop.f32.mrf.mxu0
    %v647 = vadd.f32 0.0, %v646
    %648 = vdwg.mxu0
    %649 = vrot.lane.b32.xlu0 %v92, 104
    %v650 = vpop.permute.xlu0 %649
    %651 = vrot.lane.b32.xlu0 %v92, 72
    %v652 = vpop.permute.xlu0 %651
    %v653 = vsel %vm111, %v650, 0
    %v655 = vsel %vm111, %v652, 0
    %657 = vmatpush.xpose.msra.mxu0 0.0
    %658 = vmatpush.xpose.msra.mxu0 0.0
    %659 = vmatpush.xpose.msra.mxu0 0.0
    %660 = vmatpush.xpose.msra.mxu0 0.0
    %661 = vmatpush.xpose.msra.mxu0 0.0
    %662 = vmatpush.xpose.msra.mxu0 0.0
    %663 = vmatpush.xpose.msra.mxu0 0.0
    %664 = vmatpush.xpose.msra.mxu0 0.0
    %665 = vmatpush.xpose.msra.mxu0 0.0
    %666 = vmatpush.xpose.msra.mxu0 0.0
    %667 = vmatpush.xpose.msra.mxu0 0.0
    %668 = vmatpush.xpose.msra.mxu0 0.0
    %669 = vmatpush.xpose.msra.mxu0 0.0
    %670 = vmatpush.xpose.msra.mxu0 0.0
    %671 = vmatpush.xpose.msra.mxu0 0.0
    %672 = vmatpush.xpose.msra.mxu0 %v655
    %673 = vmatmul.f32.gmra.mxu0 %v653
    %v674 = vpop.f32.mrf.mxu0
    %v675 = vadd.f32 0.0, %v674
    %676 = vdwg.mxu0
    %v677 = vmul.f32 %v647, 0.35355338
    %v678 = vmul.f32 %v675, 0.35355338
    %v679 = vsel %vm106, %v677, -1000000.0
    %v680 = vsel %vm107, %v678, -1000000.0
    %v681 = vsel %vm111, %v679, -inf
    %682 = vmax.xlane.f32.xlu0 %v681
    %v683 = vpop.xlane.xlu0 %682
    %v684 = vsel %vm111, %v680, -inf
    %685 = vmax.xlane.f32.xlu0 %v684
    %v686 = vpop.xlane.xlu0 %685
    %v687 = vsub.f32 %v679, %v683
    %v688 = vsub.f32 %v680, %v686
    %v689 = vmul.f32 %v687, 1.442695
    %v690 = vpow.pop %v689
    %v691 = vmul.f32 %v688, 1.442695
    %v692 = vpow.pop %v691
    %v693 = vsel %vm111, %v690, 0.0
    %694 = vadd.xlane.f32.xlu0 %v693
    %v695 = vpop.xlane.xlu0 %694
    %v696 = vsel %vm111, %v692, 0.0
    %697 = vadd.xlane.f32.xlu0 %v696
    %v698 = vpop.xlane.xlu0 %697
    %v699 = vrcp.pop %v695
    %v700 = vrcp.pop %v698
    %v701 = vmul.f32 %v695, %v699
    %v702 = vmul.f32 %v698, %v700
    %v703 = vsub.f32 2.0, %v701
    %v704 = vsub.f32 2.0, %v702
    %v705 = vmul.f32 %v699, %v703
    %v706 = vmul.f32 %v700, %v704
    %v707 = vmul.f32 %v690, %v705
    %v708 = vmul.f32 %v692, %v706
    %709 = vrot.lane.b32.xlu0 %v89, 40
    %v710 = vpop.permute.xlu0 %709
    %v713 = vsel %vm111, %v707, 0
    %715 = vmatpush.msra.mxu0 0.0
    %716 = vmatpush.msra.mxu0 0.0
    %717 = vmatpush.msra.mxu0 0.0
    %718 = vmatpush.msra.mxu0 0.0
    %719 = vmatpush.msra.mxu0 0.0
    %720 = vmatpush.msra.mxu0 0.0
    %721 = vmatpush.msra.mxu0 0.0
    %722 = vmatpush.msra.mxu0 0.0
    %723 = vmatpush.msra.mxu0 0.0
    %724 = vmatpush.msra.mxu0 0.0
    %725 = vmatpush.msra.mxu0 0.0
    %726 = vmatpush.msra.mxu0 0.0
    %727 = vmatpush.msra.mxu0 0.0
    %728 = vmatpush.msra.mxu0 0.0
    %729 = vmatpush.msra.mxu0 0.0
    %730 = vmatpush.msra.mxu0 %v710
    %731 = vmatmul.f32.gmra.mxu0 %v713
    %v732 = vpop.f32.mrf.mxu0
    %v733 = vadd.f32 0.0, %v732
    %734 = vdwg.mxu0
    %735 = vrot.lane.b32.xlu0 %v92, 40
    %v736 = vpop.permute.xlu0 %735
    %v739 = vsel %vm111, %v708, 0
    %741 = vmatpush.msra.mxu0 0.0
    %742 = vmatpush.msra.mxu0 0.0
    %743 = vmatpush.msra.mxu0 0.0
    %744 = vmatpush.msra.mxu0 0.0
    %745 = vmatpush.msra.mxu0 0.0
    %746 = vmatpush.msra.mxu0 0.0
    %747 = vmatpush.msra.mxu0 0.0
    %748 = vmatpush.msra.mxu0 0.0
    %749 = vmatpush.msra.mxu0 0.0
    %750 = vmatpush.msra.mxu0 0.0
    %751 = vmatpush.msra.mxu0 0.0
    %752 = vmatpush.msra.mxu0 0.0
    %753 = vmatpush.msra.mxu0 0.0
    %754 = vmatpush.msra.mxu0 0.0
    %755 = vmatpush.msra.mxu0 0.0
    %756 = vmatpush.msra.mxu0 %v736
    %757 = vmatmul.f32.gmra.mxu0 %v739
    %v758 = vpop.f32.mrf.mxu0
    %v759 = vadd.f32 0.0, %v758
    %760 = vdwg.mxu0
    %s761 = scalar_lea.vmem %s3, 24
    %v762 = vld [vmem:[%s761] sm:$0xff]
    %v764 = vsel %vm111, %v733, 0
    %v767 = vsel %vm111, %v759, 0
    %769 = vmatpush.msra.mxu0 0.0
    %770 = vmatpush.msra.mxu0 0.0
    %771 = vmatpush.msra.mxu0 0.0
    %772 = vmatpush.msra.mxu0 0.0
    %773 = vmatpush.msra.mxu0 0.0
    %774 = vmatpush.msra.mxu0 0.0
    %775 = vmatpush.msra.mxu0 0.0
    %776 = vmatpush.msra.mxu0 0.0
    %777 = vmatpush.msra.mxu0 0.0
    %778 = vmatpush.msra.mxu0 0.0
    %779 = vmatpush.msra.mxu0 0.0
    %780 = vmatpush.msra.mxu0 0.0
    %781 = vmatpush.msra.mxu0 0.0
    %782 = vmatpush.msra.mxu0 0.0
    %783 = vmatpush.msra.mxu0 0.0
    %784 = vmatpush.msra.mxu0 %v762
    %785 = vmatmul.f32.gmra.mxu0 %v764
    %v786 = vpop.f32.mrf.mxu0
    %v787 = vadd.f32 0.0, %v786
    %788 = vmatmul.f32.gmra.mxu0 %v767
    %v789 = vpop.f32.mrf.mxu0
    %v790 = vadd.f32 0.0, %v789
    %791 = vdwg.mxu0
    %v792 = vadd.f32 %v619, %v787
    %v793 = vadd.f32 %v620, %v790
    %v794 = vadd.f32 %v792, %v58
    %v795 = vadd.f32 %v793, %v59
    %v796 = vld [vmem:[%s4] sm:$0x1]
    %v797 = vld [vmem:[%s5] sm:$0x1]
    %v798 = vsel %vm64, %v794, 0.0
    %799 = vadd.xlane.f32.xlu0 %v798
    %v800 = vpop.xlane.xlu0 %799
    %v801 = vsel %vm64, %v795, 0.0
    %802 = vadd.xlane.f32.xlu0 %v801
    %v803 = vpop.xlane.xlu0 %802
    %v804 = vrcp.pop 32.0
    %v805 = vmul.f32 32.0, %v804
    %v806 = vsub.f32 1.0, %v805
    %v807 = vmul.f32 %v804, %v806
    %v808 = vadd.f32 %v804, %v807
    %vm809 = vweird.f32 %v804
    %v810 = vsel %vm809, %v804, %v808
    %v811 = vmul.f32 %v800, %v810
    %v812 = vmul.f32 %v803, %v810
    %v813 = vsub.f32 %v794, %v811
    %v814 = vsub.f32 %v795, %v812
    %v815 = vmul.f32 %v813, %v813
    %v816 = vmul.f32 %v814, %v814
    %v817 = vsel %vm64, %v815, 0.0
    %818 = vadd.xlane.f32.xlu0 %v817
    %v819 = vpop.xlane.xlu0 %818
    %v820 = vsel %vm64, %v816, 0.0
    %821 = vadd.xlane.f32.xlu0 %v820
    %v822 = vpop.xlane.xlu0 %821
    %v823 = vmul.f32 %v819, %v810
    %v824 = vmul.f32 %v822, %v810
    %v825 = vadd.f32 %v823, 1e-05
    %v826 = vadd.f32 %v824, 1e-05
    %v827 = vrsqrt.pop %v825
    %v828 = vmul.f32 %v827, %v825
    %v829 = vmul.f32 %v828, %v827
    %v830 = vmul.f32 0.5, %v829
    %v831 = vsub.f32 1.5, %v830
    %v832 = vmul.f32 %v827, %v831
    %vm833 = vweird.f32 %v825
    %vm834 = vweird.f32 %v827
    %vm835 = vmor %vm833, %vm834
    %v836 = vsel %vm835, %v827, %v832
    %v837 = vrsqrt.pop %v826
    %v838 = vmul.f32 %v837, %v826
    %v839 = vmul.f32 %v838, %v837
    %v840 = vmul.f32 0.5, %v839
    %v841 = vsub.f32 1.5, %v840
    %v842 = vmul.f32 %v837, %v841
    %vm843 = vweird.f32 %v826
    %vm844 = vweird.f32 %v837
    %vm845 = vmor %vm843, %vm844
    %v846 = vsel %vm845, %v837, %v842
    %v847 = vmul.f32 %v813, %v836
    %v848 = vmul.f32 %v814, %v846
    %v850 = vperm.slane %v796, 0
    %v852 = vmul.f32 %v847, %v850
    %v853 = vmul.f32 %v848, %v850
    %v855 = vperm.slane %v797, 0
    %v857 = vadd.f32 %v852, %v855
    %v858 = vadd.f32 %v853, %v855
    %v859 = vld [vmem:[%s6] sm:$0xff]
    %v860 = vld [vmem:[%s6 + $0x8] sm:$0xff]
    %v861 = vld [vmem:[%s6 + $0x10] sm:$0xff]
    %v862 = vld [vmem:[%s6 + $0x18] sm:$0xff]
    %v863 = vld [vmem:[%s7] sm:$0x1]
    %v865 = vperm.slane %v863, 0
    %v868 = vsel %vm64, %v857, 0
    %v871 = vsel %vm64, %v858, 0
    %873 = vmatpush.msra.mxu0 0.0
    %874 = vmatpush.msra.mxu0 0.0
    %875 = vmatpush.msra.mxu0 0.0
    %876 = vmatpush.msra.mxu0 0.0
    %877 = vmatpush.msra.mxu0 0.0
    %878 = vmatpush.msra.mxu0 0.0
    %879 = vmatpush.msra.mxu0 0.0
    %880 = vmatpush.msra.mxu0 0.0
    %881 = vmatpush.msra.mxu0 0.0
    %882 = vmatpush.msra.mxu0 0.0
    %883 = vmatpush.msra.mxu0 0.0
    %884 = vmatpush.msra.mxu0 0.0
    %885 = vmatpush.msra.mxu0 %v862
    %886 = vmatpush.msra.mxu0 %v861
    %887 = vmatpush.msra.mxu0 %v860
    %888 = vmatpush.msra.mxu0 %v859
    %889 = vmatmul.f32.gmra.mxu0 %v868
    %v890 = vpop.f32.mrf.mxu0
    %v891 = vadd.f32 %v865, %v890
    %892 = vmatmul.f32.gmra.mxu0 %v871
    %v893 = vpop.f32.mrf.mxu0
    %v894 = vadd.f32 %v865, %v893
    %895 = vdwg.mxu0
    %v896 = vmax.f32 %v891, 0.0
    %v897 = vmax.f32 %v894, 0.0
    %v898 = vld [vmem:[%s8] sm:$0xff]
    %v899 = vld [vmem:[%s8 + $0x8] sm:$0xff]
    %v900 = vld [vmem:[%s8 + $0x10] sm:$0xff]
    %v901 = vld [vmem:[%s8 + $0x18] sm:$0xff]
    %v902 = vld [vmem:[%s8 + $0x20] sm:$0xff]
    %v903 = vld [vmem:[%s8 + $0x28] sm:$0xff]
    %v904 = vld [vmem:[%s8 + $0x30] sm:$0xff]
    %v905 = vld [vmem:[%s8 + $0x38] sm:$0xff]
    %v906 = vld [vmem:[%s9] sm:$0x1]
    %v908 = vperm.slane %v906, 0
    %vm910 = vcmask 523264
    %v912 = vsel %vm910, %v896, 0
    %v915 = vsel %vm910, %v897, 0
    %917 = vmatpush.msra.mxu0 0.0
    %918 = vmatpush.msra.mxu0 0.0
    %919 = vmatpush.msra.mxu0 0.0
    %920 = vmatpush.msra.mxu0 0.0
    %921 = vmatpush.msra.mxu0 0.0
    %922 = vmatpush.msra.mxu0 0.0
    %923 = vmatpush.msra.mxu0 0.0
    %924 = vmatpush.msra.mxu0 0.0
    %925 = vmatpush.msra.mxu0 %v905
    %926 = vmatpush.msra.mxu0 %v904
    %927 = vmatpush.msra.mxu0 %v903
    %928 = vmatpush.msra.mxu0 %v902
    %929 = vmatpush.msra.mxu0 %v901
    %930 = vmatpush.msra.mxu0 %v900
    %931 = vmatpush.msra.mxu0 %v899
    %932 = vmatpush.msra.mxu0 %v898
    %933 = vmatmul.f32.gmra.mxu0 %v912
    %v934 = vpop.f32.mrf.mxu0
    %v935 = vadd.f32 %v908, %v934
    %936 = vmatmul.f32.gmra.mxu0 %v915
    %v937 = vpop.f32.mrf.mxu0
    %v938 = vadd.f32 %v908, %v937
    %939 = vdwg.mxu0
    %v940 = vadd.f32 %v935, %v857
    %v941 = vadd.f32 %v938, %v858
    %v942 = vld [vmem:[%s10] sm:$0x1]
    %v943 = vld [vmem:[%s11] sm:$0x1]
    %v944 = vsel %vm64, %v940, 0.0
    %945 = vadd.xlane.f32.xlu0 %v944
    %v946 = vpop.xlane.xlu0 %945
    %v947 = vsel %vm64, %v941, 0.0
    %948 = vadd.xlane.f32.xlu0 %v947
    %v949 = vpop.xlane.xlu0 %948
    %v950 = vmul.f32 %v946, %v810
    %v951 = vmul.f32 %v949, %v810
    %v952 = vsub.f32 %v940, %v950
    %v953 = vsub.f32 %v941, %v951
    %v954 = vmul.f32 %v952, %v952
    %v955 = vmul.f32 %v953, %v953
    %v956 = vsel %vm64, %v954, 0.0
    %957 = vadd.xlane.f32.xlu0 %v956
    %v958 = vpop.xlane.xlu0 %957
    %v959 = vsel %vm64, %v955, 0.0
    %960 = vadd.xlane.f32.xlu0 %v959
    %v961 = vpop.xlane.xlu0 %960
    %v962 = vmul.f32 %v958, %v810
    %v963 = vmul.f32 %v961, %v810
    %v964 = vadd.f32 %v962, 1e-05
    %v965 = vadd.f32 %v963, 1e-05
    %v966 = vrsqrt.pop %v964
    %v967 = vmul.f32 %v966, %v964
    %v968 = vmul.f32 %v967, %v966
    %v969 = vmul.f32 0.5, %v968
    %v970 = vsub.f32 1.5, %v969
    %v971 = vmul.f32 %v966, %v970
    %vm972 = vweird.f32 %v964
    %vm973 = vweird.f32 %v966
    %vm974 = vmor %vm972, %vm973
    %v975 = vsel %vm974, %v966, %v971
    %v976 = vrsqrt.pop %v965
    %v977 = vmul.f32 %v976, %v965
    %v978 = vmul.f32 %v977, %v976
    %v979 = vmul.f32 0.5, %v978
    %v980 = vsub.f32 1.5, %v979
    %v981 = vmul.f32 %v976, %v980
    %vm982 = vweird.f32 %v965
    %vm983 = vweird.f32 %v976
    %vm984 = vmor %vm982, %vm983
    %v985 = vsel %vm984, %v976, %v981
    %v986 = vmul.f32 %v952, %v975
    %v987 = vmul.f32 %v953, %v985
    %v989 = vperm.slane %v942, 0
    %v991 = vmul.f32 %v986, %v989
    %v992 = vmul.f32 %v987, %v989
    %v994 = vperm.slane %v943, 0
    %v996 = vadd.f32 %v991, %v994
    %v997 = vadd.f32 %v992, %v994
    %998 = vst.msk [vmem:[#allocation5] sm:$0xff] %vm64, %v996
    %999 = vst.msk [vmem:[#allocation5 + $0x8] sm:$0xff] %vm64, %v997
    // Predicated region
    $region54: #{tpu_custom_call.1} parent=1 // pred_check
      _
    $region55: #{tpu_custom_call.1} parent=1 // pred_check_branch
      %1001 = sbr.rel (0) target = $region57
    $region56: #{tpu_custom_call.1} parent=1 // pred_region
      %1003 = vsyncadd [#allocation4], 0
      %s1004 = sshll.u32 [#allocation5], 4
      %s1005 = int_to_ptr.vmem [resolvable:$true] %s1004
      %s1006 = sshll.u32 %s12, 4
      %s1007 = int_to_ptr.hbm [resolvable:$true] %s1006
      %1012 = dma.vmem_to_hbm [thread:$0]  %s1005, 256, %s1007, [#allocation4], 128, 128, 8
    $region57: #{tpu_custom_call.1} parent=1 // pred_fallthru
      _
    // Predicated region
    $region58: #{tpu_custom_call.1} parent=1 // pred_check
      _
    $region59: #{tpu_custom_call.1} parent=1 // pred_check_branch
      %1014 = sbr.rel (0) target = $region61
    $region60: #{tpu_custom_call.1} parent=1 // pred_region
      %1016 = dma.done [#allocation4], 256
    $region61: #{tpu_custom_call.1} parent=1 // pred_fallthru
      _
    %1017 = vsyncpa [#allocation3], 1
    %1018 = vsyncpa [#allocation4], 1

</llo_original>
